<compile_context>
chip_gen: v5e
topology: v5e:2x2
jax: 0.10.0
libtpu: 0.0.40
codegen_flags: <defaults>
</compile_context>

<pallas_src>
import jax
import jax.numpy as jnp
from jax.experimental import pallas as pl
from jax.experimental.pallas import tpu as pltpu

_LN_EPS = 1e-5


def _round_up(x, m):
    return (x + m - 1) // m * m


def _vmem_capacity_bytes():
    try:
        return int(pltpu.get_tpu_info().vmem_capacity_bytes)
    except Exception:
        return 64 << 20  # conservative fallback: v7x per-TensorCore VMEM


def _make_fused_mlp_kernel(num_layers):
    """Kernel body: (x_ref, [w_ref, aux_ref] * L, o_ref)."""

    def kernel(x_ref, *refs):
        o_ref = refs[-1]
        p = refs[:-1]
        h = x_ref[...].astype(jnp.float32)
        # Static unroll is fine for the shallow MLPs this module builds.
        # TODO(synk): use lax.fori_loop over stacked weights for 8+ uniform
        # layers (bounds vreg live ranges / code size).
        for l in range(num_layers):
            w = p[2 * l][...]                    # (d_in, d_out)
            aux = p[2 * l + 1][...]              # (8, d_out): rows b, gamma, beta
            b = aux[0:1, :]
            gamma = aux[1:2, :]
            beta = aux[2:3, :]

            # Linear on the MXU; operands may be bf16, accumulation is f32.
            h = jnp.dot(h.astype(w.dtype), w,
                        preferred_element_type=jnp.float32) + b
            # ReLU (VPU).
            h = jnp.maximum(h, 0.0)
            # LayerNorm: two-pass (mean-subtracted) variance in f32.
            mean = jnp.mean(h, axis=-1, keepdims=True)
            c = h - mean
            var = jnp.mean(c * c, axis=-1, keepdims=True)
            h = c * jax.lax.rsqrt(var + _LN_EPS) * gamma + beta
        o_ref[...] = h.astype(o_ref.dtype)

    return kernel


def mlp_forward(x, params, *, hidden_sizes, block_batch=None,
                matmul_dtype=jnp.bfloat16, single_buffer_params=True):
    """Fused MLPLayer forward: repeated LayerNorm(ReLU(x @ W + b))."""
    batch, in_dim = x.shape
    hidden_sizes = tuple(int(h) for h in hidden_sizes)
    num_layers = len(hidden_sizes)
    dims = (in_dim,) + hidden_sizes
    out_dim = dims[-1]
    x_itemsize = jnp.dtype(x.dtype).itemsize

    # ---- per-generation VMEM budget ---------------------------------------
    vmem_budget = int(0.65 * _vmem_capacity_bytes())
    w_itemsize = jnp.dtype(matmul_dtype).itemsize
    param_bytes = sum(dims[l] * dims[l + 1] * w_itemsize + 8 * dims[l + 1] * 4
                      for l in range(num_layers))
    resident = param_bytes * (1 if single_buffer_params else 2)

    # ---- batch tile: biggest tile the remaining budget allows -------------
    row_io = 2 * (in_dim + out_dim) * x_itemsize        # double-buffered x/out
    row_live = 6 * max(dims) * 4                        # in-flight f32 work set
    if block_batch is None:
        avail = max(vmem_budget - resident, 2 << 20)
        cap = max(128, min(1024, avail // (row_io + row_live)))
        if batch <= cap:
            block_batch = _round_up(batch, 8)            # tiny batch: one tile
        else:
            nblocks = max(2, -(-batch // cap))            # >=2 blocks (2 TCs)
            block_batch = _round_up(-(-batch // nblocks), 8)
    block_batch = max(8, _round_up(int(block_batch), 8))

    footprint = resident + block_batch * (row_io + row_live)
    if footprint > vmem_budget:
        # TODO(synk): tile large weights over an N (or K) grid axis instead of
        # keeping them fully VMEM-resident.
        raise ValueError(
            f"MLP parameters + tiles ({footprint >> 20} MiB) exceed the VMEM "
            f"budget ({vmem_budget >> 20} MiB); reduce block_batch or add "
            "weight tiling.")

    # ---- host-side prep: only sublane-align the batch; no feature padding -
    pad_batch = _round_up(batch, 8)
    x_in = x if pad_batch == batch else jnp.pad(x, ((0, pad_batch - batch), (0, 0)))
    grid = (pl.cdiv(pad_batch, block_batch),)

    inputs = [x_in]
    for l, (w, b, gamma, beta) in enumerate(params):
        d_in, d_out = dims[l], dims[l + 1]
        w_c = w.astype(matmul_dtype).reshape(d_in, d_out)
        aux = jnp.zeros((8, d_out), jnp.float32)
        aux = aux.at[0].set(jnp.ravel(b).astype(jnp.float32))
        aux = aux.at[1].set(jnp.ravel(gamma).astype(jnp.float32))
        aux = aux.at[2].set(jnp.ravel(beta).astype(jnp.float32))
        inputs += [w_c, aux]

    kernel = _make_fused_mlp_kernel(num_layers)
    out_shape = jax.ShapeDtypeStruct((pad_batch, out_dim), x.dtype)

    def build(param_mode):
        in_specs = [pl.BlockSpec((block_batch, in_dim), lambda i: (i, 0))]
        for l in range(num_layers):
            d_in, d_out = dims[l], dims[l + 1]
            # Constant index_maps: parameters are DMA'd once and stay
            # VMEM-resident across the whole batch grid.
            if param_mode is None:
                in_specs += [pl.BlockSpec((d_in, d_out), lambda i: (0, 0)),
                             pl.BlockSpec((8, d_out), lambda i: (0, 0))]
            else:
                in_specs += [
                    pl.BlockSpec((d_in, d_out), lambda i: (0, 0),
                                 pipeline_mode=param_mode),
                    pl.BlockSpec((8, d_out), lambda i: (0, 0),
                                 pipeline_mode=param_mode),
                ]
        return pl.pallas_call(
            kernel,
            out_shape=out_shape,
            grid_spec=pl.GridSpec(
                grid=grid,
                in_specs=in_specs,
                out_specs=pl.BlockSpec((block_batch, out_dim), lambda i: (i, 0)),
            ),
            compiler_params=pltpu.CompilerParams(
                dimension_semantics=("parallel",),
                vmem_limit_bytes=vmem_budget,
            ),
        )

    if single_buffer_params:
        try:
            out_p = build(pl.Buffered(1))(*inputs)
        except Exception:
            # Running JAX rejects Buffered(1) here -> default double buffering.
            out_p = build(None)(*inputs)
    else:
        out_p = build(None)(*inputs)

    return out_p if pad_batch == batch else out_p[:batch]


def init_mlp_params(key, input_dim, hidden_sizes, gain):
    """Parameters matching MLPLayer.__init__ shapes.

    Linear weights: orthogonal init scaled by gain, stored as (in, out) so the
    kernel computes x @ W (== PyTorch x @ weight.T).  Linear biases: zeros.
    LayerNorm: weight=1, bias=0.
    """
    params = []
    dims = [input_dim] + list(hidden_sizes)
    for i in range(len(hidden_sizes)):
        key, wk = jax.random.split(key)
        fan_in, fan_out = dims[i], dims[i + 1]
        w = jax.nn.initializers.orthogonal(scale=gain)(
            wk, (fan_in, fan_out), jnp.float32)
        b = jnp.zeros((1, fan_out), jnp.float32)
        gamma = jnp.ones((1, fan_out), jnp.float32)
        beta = jnp.zeros((1, fan_out), jnp.float32)
        params.append((w, b, gamma, beta))
    return params


if __name__ == "__main__":
    batch = 64
    input_dim = 32
    hidden_sizes = (64, 32)
    gain = float(jnp.sqrt(2.0))          # nn.init.calculate_gain("relu")

    key = jax.random.PRNGKey(0)
    key, xk = jax.random.split(key)
    x = jax.random.normal(xk, (batch, input_dim), jnp.float32)
    params = init_mlp_params(key, input_dim, hidden_sizes, gain)

    # Pure-JAX reference of the same forward pass.
    ref = x
    for (w, b, g, bt) in params:
        h = jnp.maximum(ref @ w + b, 0.0)
        mu = jnp.mean(h, axis=-1, keepdims=True)
        var = jnp.mean((h - mu) ** 2, axis=-1, keepdims=True)
        ref = (h - mu) * jax.lax.rsqrt(var + _LN_EPS) * g + bt

    # f32 MXU operands: tight tolerance (numerics check).
    out_f32 = jax.block_until_ready(
        mlp_forward(x, params, hidden_sizes=hidden_sizes,
                    matmul_dtype=jnp.float32))
    assert out_f32.shape == (batch, hidden_sizes[-1])
    assert jnp.allclose(out_f32, ref, atol=1e-4, rtol=1e-4), float(
        jnp.max(jnp.abs(out_f32 - ref)))

    # Default path: bf16 MXU operands (recommended on v5e/v6e/v7x), f32
    # accumulation + epilogue.  Error is depth-dependent; looser tolerance.
    out_bf16 = jax.block_until_ready(
        mlp_forward(x, params, hidden_sizes=hidden_sizes))
    assert out_bf16.shape == (batch, hidden_sizes[-1])
    assert jnp.allclose(out_bf16, ref, atol=5e-2, rtol=5e-2)

    print("KERNEL_OK")
</pallas_src>

<mosaic_0001>
module attributes {stable_mosaic.version = 11 : i64} {
  func.func @kernel(%arg0: i32, %arg1: memref<64x32xf32, #tpu.memory_space<vmem>>, %arg2: memref<32x64xf32, #tpu.memory_space<vmem>>, %arg3: memref<8x64xf32, #tpu.memory_space<vmem>>, %arg4: memref<64x32xf32, #tpu.memory_space<vmem>>, %arg5: memref<8x32xf32, #tpu.memory_space<vmem>>, %arg6: memref<64x32xf32, #tpu.memory_space<vmem>>) attributes {dimension_semantics = [#tpu.dimension_semantics<parallel>], iteration_bounds = array<i64: 1>, scalar_prefetch = 0 : i64, scratch_operands = 0 : i64, tpu.core_type = #tpu.core_type<tc>, window_params = [{transform_indices = @transform_0, window_bounds = array<i64: 64, 32>}, {pipeline_mode = #tpu.pipeline_mode<synchronous>, transform_indices = @transform_1, window_bounds = array<i64: 32, 64>}, {pipeline_mode = #tpu.pipeline_mode<synchronous>, transform_indices = @transform_2, window_bounds = array<i64: 8, 64>}, {pipeline_mode = #tpu.pipeline_mode<synchronous>, transform_indices = @transform_3, window_bounds = array<i64: 64, 32>}, {pipeline_mode = #tpu.pipeline_mode<synchronous>, transform_indices = @transform_4, window_bounds = array<i64: 8, 32>}, {transform_indices = @transform_5, window_bounds = array<i64: 64, 32>}]} {
    %c0 = arith.constant 0 : index
    %c0_0 = arith.constant 0 : index
    %0 = vector.load %arg1[%c0, %c0_0] : memref<64x32xf32, #tpu.memory_space<vmem>>, vector<64x32xf32>
    %c0_1 = arith.constant 0 : index
    %c0_2 = arith.constant 0 : index
    %1 = vector.load %arg2[%c0_1, %c0_2] : memref<32x64xf32, #tpu.memory_space<vmem>>, vector<32x64xf32>
    %c0_3 = arith.constant 0 : index
    %c0_4 = arith.constant 0 : index
    %2 = vector.load %arg3[%c0_3, %c0_4] : memref<8x64xf32, #tpu.memory_space<vmem>>, vector<8x64xf32>
    %3 = vector.extract_strided_slice %2 {offsets = [0, 0], sizes = [1, 64], strides = [1, 1]} : vector<8x64xf32> to vector<1x64xf32>
    %4 = vector.extract_strided_slice %2 {offsets = [1, 0], sizes = [1, 64], strides = [1, 1]} : vector<8x64xf32> to vector<1x64xf32>
    %5 = vector.extract_strided_slice %2 {offsets = [2, 0], sizes = [1, 64], strides = [1, 1]} : vector<8x64xf32> to vector<1x64xf32>
    %cst = arith.constant dense<0.000000e+00> : vector<64x64xf32>
    %6 = tpu.matmul %0, %1, %cst {dimension_numbers = #tpu.dot_dimension_numbers<[1], [0], [0], [1], [0, 0, 1, 1], [], []>} : vector<64x32xf32>, vector<32x64xf32>, vector<64x64xf32> -> vector<64x64xf32>
    %7 = vector.broadcast %3 : vector<1x64xf32> to vector<64x64xf32>
    %8 = arith.addf %6, %7 : vector<64x64xf32>
    %cst_5 = arith.constant 0.000000e+00 : f32
    %9 = vector.broadcast %cst_5 : f32 to vector<64x64xf32>
    %10 = arith.maximumf %8, %9 : vector<64x64xf32>
    %cst_6 = arith.constant dense<0.000000e+00> : vector<64xf32>
    %11 = vector.multi_reduction <add>, %10, %cst_6 [1] : vector<64x64xf32> to vector<64xf32>
    %12 = vector.shape_cast %11 : vector<64xf32> to vector<64x1xf32>
    %cst_7 = arith.constant 6.400000e+01 : f32
    %13 = vector.broadcast %cst_7 : f32 to vector<64x1xf32>
    %14 = arith.divf %12, %13 : vector<64x1xf32>
    %15 = vector.broadcast %14 : vector<64x1xf32> to vector<64x64xf32>
    %16 = arith.subf %10, %15 : vector<64x64xf32>
    %17 = arith.mulf %16, %16 : vector<64x64xf32>
    %cst_8 = arith.constant dense<0.000000e+00> : vector<64xf32>
    %18 = vector.multi_reduction <add>, %17, %cst_8 [1] : vector<64x64xf32> to vector<64xf32>
    %19 = vector.shape_cast %18 : vector<64xf32> to vector<64x1xf32>
    %cst_9 = arith.constant 6.400000e+01 : f32
    %20 = vector.broadcast %cst_9 : f32 to vector<64x1xf32>
    %21 = arith.divf %19, %20 : vector<64x1xf32>
    %cst_10 = arith.constant 9.99999974E-6 : f32
    %22 = vector.broadcast %cst_10 : f32 to vector<64x1xf32>
    %23 = arith.addf %21, %22 : vector<64x1xf32>
    %24 = math.rsqrt %23 : vector<64x1xf32>
    %25 = vector.broadcast %24 : vector<64x1xf32> to vector<64x64xf32>
    %26 = arith.mulf %16, %25 : vector<64x64xf32>
    %27 = vector.broadcast %4 : vector<1x64xf32> to vector<64x64xf32>
    %28 = arith.mulf %26, %27 : vector<64x64xf32>
    %29 = vector.broadcast %5 : vector<1x64xf32> to vector<64x64xf32>
    %30 = arith.addf %28, %29 : vector<64x64xf32>
    %c0_11 = arith.constant 0 : index
    %c0_12 = arith.constant 0 : index
    %31 = vector.load %arg4[%c0_11, %c0_12] : memref<64x32xf32, #tpu.memory_space<vmem>>, vector<64x32xf32>
    %c0_13 = arith.constant 0 : index
    %c0_14 = arith.constant 0 : index
    %32 = vector.load %arg5[%c0_13, %c0_14] : memref<8x32xf32, #tpu.memory_space<vmem>>, vector<8x32xf32>
    %33 = vector.extract_strided_slice %32 {offsets = [0, 0], sizes = [1, 32], strides = [1, 1]} : vector<8x32xf32> to vector<1x32xf32>
    %34 = vector.extract_strided_slice %32 {offsets = [1, 0], sizes = [1, 32], strides = [1, 1]} : vector<8x32xf32> to vector<1x32xf32>
    %35 = vector.extract_strided_slice %32 {offsets = [2, 0], sizes = [1, 32], strides = [1, 1]} : vector<8x32xf32> to vector<1x32xf32>
    %cst_15 = arith.constant dense<0.000000e+00> : vector<64x32xf32>
    %36 = tpu.matmul %30, %31, %cst_15 {dimension_numbers = #tpu.dot_dimension_numbers<[1], [0], [0], [1], [0, 0, 1, 1], [], []>} : vector<64x64xf32>, vector<64x32xf32>, vector<64x32xf32> -> vector<64x32xf32>
    %37 = vector.broadcast %33 : vector<1x32xf32> to vector<64x32xf32>
    %38 = arith.addf %36, %37 : vector<64x32xf32>
    %cst_16 = arith.constant 0.000000e+00 : f32
    %39 = vector.broadcast %cst_16 : f32 to vector<64x32xf32>
    %40 = arith.maximumf %38, %39 : vector<64x32xf32>
    %cst_17 = arith.constant dense<0.000000e+00> : vector<64xf32>
    %41 = vector.multi_reduction <add>, %40, %cst_17 [1] : vector<64x32xf32> to vector<64xf32>
    %42 = vector.shape_cast %41 : vector<64xf32> to vector<64x1xf32>
    %cst_18 = arith.constant 3.200000e+01 : f32
    %43 = vector.broadcast %cst_18 : f32 to vector<64x1xf32>
    %44 = arith.divf %42, %43 : vector<64x1xf32>
    %45 = vector.broadcast %44 : vector<64x1xf32> to vector<64x32xf32>
    %46 = arith.subf %40, %45 : vector<64x32xf32>
    %47 = arith.mulf %46, %46 : vector<64x32xf32>
    %cst_19 = arith.constant dense<0.000000e+00> : vector<64xf32>
    %48 = vector.multi_reduction <add>, %47, %cst_19 [1] : vector<64x32xf32> to vector<64xf32>
    %49 = vector.shape_cast %48 : vector<64xf32> to vector<64x1xf32>
    %cst_20 = arith.constant 3.200000e+01 : f32
    %50 = vector.broadcast %cst_20 : f32 to vector<64x1xf32>
    %51 = arith.divf %49, %50 : vector<64x1xf32>
    %cst_21 = arith.constant 9.99999974E-6 : f32
    %52 = vector.broadcast %cst_21 : f32 to vector<64x1xf32>
    %53 = arith.addf %51, %52 : vector<64x1xf32>
    %54 = math.rsqrt %53 : vector<64x1xf32>
    %55 = vector.broadcast %54 : vector<64x1xf32> to vector<64x32xf32>
    %56 = arith.mulf %46, %55 : vector<64x32xf32>
    %57 = vector.broadcast %34 : vector<1x32xf32> to vector<64x32xf32>
    %58 = arith.mulf %56, %57 : vector<64x32xf32>
    %59 = vector.broadcast %35 : vector<1x32xf32> to vector<64x32xf32>
    %60 = arith.addf %58, %59 : vector<64x32xf32>
    %c0_22 = arith.constant 0 : index
    %c0_23 = arith.constant 0 : index
    %61 = vector.load %arg6[%c0_22, %c0_23] : memref<64x32xf32, #tpu.memory_space<vmem>>, vector<64x32xf32>
    tpu.vector_store %arg6[%c0_22, %c0_23], %60 {strides = array<i32>} : memref<64x32xf32, #tpu.memory_space<vmem>>, vector<64x32xf32>,
    return
  }
  func.func @transform_0(%arg0: i32) -> (i32, i32) {
    %c0_i32 = arith.constant 0 : i32
    %c0_i32_0 = arith.constant 0 : i32
    return %arg0, %c0_i32 : i32, i32
  }
  func.func @transform_1(%arg0: i32) -> (i32, i32) {
    %c0_i32 = arith.constant 0 : i32
    %c0_i32_0 = arith.constant 0 : i32
    %c0_i32_1 = arith.constant 0 : i32
    return %c0_i32, %c0_i32_0 : i32, i32
  }
  func.func @transform_2(%arg0: i32) -> (i32, i32) {
    %c0_i32 = arith.constant 0 : i32
    %c0_i32_0 = arith.constant 0 : i32
    %c0_i32_1 = arith.constant 0 : i32
    return %c0_i32, %c0_i32_0 : i32, i32
  }
  func.func @transform_3(%arg0: i32) -> (i32, i32) {
    %c0_i32 = arith.constant 0 : i32
    %c0_i32_0 = arith.constant 0 : i32
    %c0_i32_1 = arith.constant 0 : i32
    return %c0_i32, %c0_i32_0 : i32, i32
  }
  func.func @transform_4(%arg0: i32) -> (i32, i32) {
    %c0_i32 = arith.constant 0 : i32
    %c0_i32_0 = arith.constant 0 : i32
    %c0_i32_1 = arith.constant 0 : i32
    return %c0_i32, %c0_i32_0 : i32, i32
  }
  func.func @transform_5(%arg0: i32) -> (i32, i32) {
    %c0_i32 = arith.constant 0 : i32
    %c0_i32_0 = arith.constant 0 : i32
    return %arg0, %c0_i32 : i32, i32
  }
}

module attributes {stable_mosaic.version = 11 : i64} {
  func.func @kernel(%arg0: i32, %arg1: memref<64x32xf32, #tpu.memory_space<vmem>>, %arg2: memref<32x64xf32, #tpu.memory_space<vmem>>, %arg3: memref<8x64xf32, #tpu.memory_space<vmem>>, %arg4: memref<64x32xf32, #tpu.memory_space<vmem>>, %arg5: memref<8x32xf32, #tpu.memory_space<vmem>>, %arg6: memref<64x32xf32, #tpu.memory_space<vmem>>) attributes {dimension_semantics = [#tpu.dimension_semantics<parallel>], iteration_bounds = array<i64: 1>, scalar_prefetch = 0 : i64, scratch_operands = 0 : i64, tpu.core_type = #tpu.core_type<tc>, window_params = [{transform_indices = @transform_0, window_bounds = array<i64: 64, 32>}, {pipeline_mode = #tpu.pipeline_mode<synchronous>, transform_indices = @transform_1, window_bounds = array<i64: 32, 64>}, {pipeline_mode = #tpu.pipeline_mode<synchronous>, transform_indices = @transform_2, window_bounds = array<i64: 8, 64>}, {pipeline_mode = #tpu.pipeline_mode<synchronous>, transform_indices = @transform_3, window_bounds = array<i64: 64, 32>}, {pipeline_mode = #tpu.pipeline_mode<synchronous>, transform_indices = @transform_4, window_bounds = array<i64: 8, 32>}, {transform_indices = @transform_5, window_bounds = array<i64: 64, 32>}]} {
    %c0 = arith.constant 0 : index
    %c0_0 = arith.constant 0 : index
    %0 = vector.load %arg1[%c0, %c0_0] : memref<64x32xf32, #tpu.memory_space<vmem>>, vector<64x32xf32>
    %c0_1 = arith.constant 0 : index
    %c0_2 = arith.constant 0 : index
    %1 = vector.load %arg2[%c0_1, %c0_2] : memref<32x64xf32, #tpu.memory_space<vmem>>, vector<32x64xf32>
    %c0_3 = arith.constant 0 : index
    %c0_4 = arith.constant 0 : index
    %2 = vector.load %arg3[%c0_3, %c0_4] : memref<8x64xf32, #tpu.memory_space<vmem>>, vector<8x64xf32>
    %3 = vector.extract_strided_slice %2 {offsets = [0, 0], sizes = [1, 64], strides = [1, 1]} : vector<8x64xf32> to vector<1x64xf32>
    %4 = vector.extract_strided_slice %2 {offsets = [1, 0], sizes = [1, 64], strides = [1, 1]} : vector<8x64xf32> to vector<1x64xf32>
    %5 = vector.extract_strided_slice %2 {offsets = [2, 0], sizes = [1, 64], strides = [1, 1]} : vector<8x64xf32> to vector<1x64xf32>
    %cst = arith.constant dense<0.000000e+00> : vector<64x64xf32>
    %6 = tpu.matmul %0, %1, %cst {dimension_numbers = #tpu.dot_dimension_numbers<[1], [0], [0], [1], [0, 0, 1, 1], [], []>} : vector<64x32xf32>, vector<32x64xf32>, vector<64x64xf32> -> vector<64x64xf32>
    %7 = vector.broadcast %3 : vector<1x64xf32> to vector<64x64xf32>
    %8 = arith.addf %6, %7 : vector<64x64xf32>
    %cst_5 = arith.constant 0.000000e+00 : f32
    %9 = vector.broadcast %cst_5 : f32 to vector<64x64xf32>
    %10 = arith.maximumf %8, %9 : vector<64x64xf32>
    %cst_6 = arith.constant dense<0.000000e+00> : vector<64xf32>
    %11 = vector.multi_reduction <add>, %10, %cst_6 [1] : vector<64x64xf32> to vector<64xf32>
    %12 = vector.shape_cast %11 : vector<64xf32> to vector<64x1xf32>
    %cst_7 = arith.constant 6.400000e+01 : f32
    %13 = vector.broadcast %cst_7 : f32 to vector<64x1xf32>
    %14 = arith.divf %12, %13 : vector<64x1xf32>
    %15 = vector.broadcast %14 : vector<64x1xf32> to vector<64x64xf32>
    %16 = arith.subf %10, %15 : vector<64x64xf32>
    %17 = arith.mulf %16, %16 : vector<64x64xf32>
    %cst_8 = arith.constant dense<0.000000e+00> : vector<64xf32>
    %18 = vector.multi_reduction <add>, %17, %cst_8 [1] : vector<64x64xf32> to vector<64xf32>
    %19 = vector.shape_cast %18 : vector<64xf32> to vector<64x1xf32>
    %cst_9 = arith.constant 6.400000e+01 : f32
    %20 = vector.broadcast %cst_9 : f32 to vector<64x1xf32>
    %21 = arith.divf %19, %20 : vector<64x1xf32>
    %cst_10 = arith.constant 9.99999974E-6 : f32
    %22 = vector.broadcast %cst_10 : f32 to vector<64x1xf32>
    %23 = arith.addf %21, %22 : vector<64x1xf32>
    %24 = math.rsqrt %23 : vector<64x1xf32>
    %25 = vector.broadcast %24 : vector<64x1xf32> to vector<64x64xf32>
    %26 = arith.mulf %16, %25 : vector<64x64xf32>
    %27 = vector.broadcast %4 : vector<1x64xf32> to vector<64x64xf32>
    %28 = arith.mulf %26, %27 : vector<64x64xf32>
    %29 = vector.broadcast %5 : vector<1x64xf32> to vector<64x64xf32>
    %30 = arith.addf %28, %29 : vector<64x64xf32>
    %c0_11 = arith.constant 0 : index
    %c0_12 = arith.constant 0 : index
    %31 = vector.load %arg4[%c0_11, %c0_12] : memref<64x32xf32, #tpu.memory_space<vmem>>, vector<64x32xf32>
    %c0_13 = arith.constant 0 : index
    %c0_14 = arith.constant 0 : index
    %32 = vector.load %arg5[%c0_13, %c0_14] : memref<8x32xf32, #tpu.memory_space<vmem>>, vector<8x32xf32>
    %33 = vector.extract_strided_slice %32 {offsets = [0, 0], sizes = [1, 32], strides = [1, 1]} : vector<8x32xf32> to vector<1x32xf32>
    %34 = vector.extract_strided_slice %32 {offsets = [1, 0], sizes = [1, 32], strides = [1, 1]} : vector<8x32xf32> to vector<1x32xf32>
    %35 = vector.extract_strided_slice %32 {offsets = [2, 0], sizes = [1, 32], strides = [1, 1]} : vector<8x32xf32> to vector<1x32xf32>
    %cst_15 = arith.constant dense<0.000000e+00> : vector<64x32xf32>
    %36 = tpu.matmul %30, %31, %cst_15 {dimension_numbers = #tpu.dot_dimension_numbers<[1], [0], [0], [1], [0, 0, 1, 1], [], []>} : vector<64x64xf32>, vector<64x32xf32>, vector<64x32xf32> -> vector<64x32xf32>
    %37 = vector.broadcast %33 : vector<1x32xf32> to vector<64x32xf32>
    %38 = arith.addf %36, %37 : vector<64x32xf32>
    %cst_16 = arith.constant 0.000000e+00 : f32
    %39 = vector.broadcast %cst_16 : f32 to vector<64x32xf32>
    %40 = arith.maximumf %38, %39 : vector<64x32xf32>
    %cst_17 = arith.constant dense<0.000000e+00> : vector<64xf32>
    %41 = vector.multi_reduction <add>, %40, %cst_17 [1] : vector<64x32xf32> to vector<64xf32>
    %42 = vector.shape_cast %41 : vector<64xf32> to vector<64x1xf32>
    %cst_18 = arith.constant 3.200000e+01 : f32
    %43 = vector.broadcast %cst_18 : f32 to vector<64x1xf32>
    %44 = arith.divf %42, %43 : vector<64x1xf32>
    %45 = vector.broadcast %44 : vector<64x1xf32> to vector<64x32xf32>
    %46 = arith.subf %40, %45 : vector<64x32xf32>
    %47 = arith.mulf %46, %46 : vector<64x32xf32>
    %cst_19 = arith.constant dense<0.000000e+00> : vector<64xf32>
    %48 = vector.multi_reduction <add>, %47, %cst_19 [1] : vector<64x32xf32> to vector<64xf32>
    %49 = vector.shape_cast %48 : vector<64xf32> to vector<64x1xf32>
    %cst_20 = arith.constant 3.200000e+01 : f32
    %50 = vector.broadcast %cst_20 : f32 to vector<64x1xf32>
    %51 = arith.divf %49, %50 : vector<64x1xf32>
    %cst_21 = arith.constant 9.99999974E-6 : f32
    %52 = vector.broadcast %cst_21 : f32 to vector<64x1xf32>
    %53 = arith.addf %51, %52 : vector<64x1xf32>
    %54 = math.rsqrt %53 : vector<64x1xf32>
    %55 = vector.broadcast %54 : vector<64x1xf32> to vector<64x32xf32>
    %56 = arith.mulf %46, %55 : vector<64x32xf32>
    %57 = vector.broadcast %34 : vector<1x32xf32> to vector<64x32xf32>
    %58 = arith.mulf %56, %57 : vector<64x32xf32>
    %59 = vector.broadcast %35 : vector<1x32xf32> to vector<64x32xf32>
    %60 = arith.addf %58, %59 : vector<64x32xf32>
    %c0_22 = arith.constant 0 : index
    %c0_23 = arith.constant 0 : index
    %61 = vector.load %arg6[%c0_22, %c0_23] : memref<64x32xf32, #tpu.memory_space<vmem>>, vector<64x32xf32>
    tpu.vector_store %arg6[%c0_22, %c0_23], %60 {strides = array<i32>} : memref<64x32xf32, #tpu.memory_space<vmem>>, vector<64x32xf32>,
    return
  }
  func.func @transform_0(%arg0: i32) -> (i32, i32) {
    %c0_i32 = arith.constant 0 : i32
    %c0_i32_0 = arith.constant 0 : i32
    return %arg0, %c0_i32 : i32, i32
  }
  func.func @transform_1(%arg0: i32) -> (i32, i32) {
    %c0_i32 = arith.constant 0 : i32
    %c0_i32_0 = arith.constant 0 : i32
    %c0_i32_1 = arith.constant 0 : i32
    return %c0_i32, %c0_i32_0 : i32, i32
  }
  func.func @transform_2(%arg0: i32) -> (i32, i32) {
    %c0_i32 = arith.constant 0 : i32
    %c0_i32_0 = arith.constant 0 : i32
    %c0_i32_1 = arith.constant 0 : i32
    return %c0_i32, %c0_i32_0 : i32, i32
  }
  func.func @transform_3(%arg0: i32) -> (i32, i32) {
    %c0_i32 = arith.constant 0 : i32
    %c0_i32_0 = arith.constant 0 : i32
    %c0_i32_1 = arith.constant 0 : i32
    return %c0_i32, %c0_i32_0 : i32, i32
  }
  func.func @transform_4(%arg0: i32) -> (i32, i32) {
    %c0_i32 = arith.constant 0 : i32
    %c0_i32_0 = arith.constant 0 : i32
    %c0_i32_1 = arith.constant 0 : i32
    return %c0_i32, %c0_i32_0 : i32, i32
  }
  func.func @transform_5(%arg0: i32) -> (i32, i32) {
    %c0_i32 = arith.constant 0 : i32
    %c0_i32_0 = arith.constant 0 : i32
    return %arg0, %c0_i32 : i32, i32
  }
}

</mosaic_0001>

<llo_original>
// kernel: tpu_custom_call.1
$region0: #{tpu_custom_call.1}
  #allocation0 [shape = 'u32[]', space=smem, size = 0x4, offset = 0x4, fixed_abs, tag = 'smem constant byte address 0x4 - core index']
  #allocation1 [shape = 'u32[72,128]{1,0:T(1,128)}', space=vmem, size = 0x9000, scoped, tag = 'internal scratch']
  %s0 = inlined_call_operand.vmem [shape: f32[64,32], index: 0, kind: input, shape index: {}]
  %s1 = inlined_call_operand.vmem [shape: f32[32,64], index: 1, kind: input, shape index: {}]
  %s2 = inlined_call_operand.vmem [shape: f32[8,64], index: 2, kind: input, shape index: {}]
  %s3 = inlined_call_operand.vmem [shape: f32[64,32], index: 3, kind: input, shape index: {}]
  %s4 = inlined_call_operand.vmem [shape: f32[8,32], index: 4, kind: input, shape index: {}]
  %s5 = inlined_call_operand.vmem [shape: f32[64,32], index: 5, kind: output, shape index: {}]
  %s6 = sld [smem:[#allocation0]]
  $region30: #{tpu_custom_call.1} parent=0
    _
  %s8 = ssub.s32 1, %s6
  %s9 = scalar_select 0, %s8, %s6
  // Predicated region
  $region2: #{tpu_custom_call.1} parent=0 // pred_check
    _
  $region3: #{tpu_custom_call.1} parent=0 // pred_check_branch
    %11 = sbr.rel (0) target = $region5
  $region4: #{tpu_custom_call.1} parent=0 // pred_region
    _
  $region5: #{tpu_custom_call.1} parent=0 // pred_fallthru
    _
  // Predicated region
  $region6: #{tpu_custom_call.1} parent=0 // pred_check
    _
  $region7: #{tpu_custom_call.1} parent=0 // pred_check_branch
    %13 = sbr.rel (0) target = $region9
  $region8: #{tpu_custom_call.1} parent=0 // pred_region
    _
  $region9: #{tpu_custom_call.1} parent=0 // pred_fallthru
    _
  // Predicated region
  $region10: #{tpu_custom_call.1} parent=0 // pred_check
    _
  $region11: #{tpu_custom_call.1} parent=0 // pred_check_branch
    %15 = sbr.rel (0) target = $region13
  $region12: #{tpu_custom_call.1} parent=0 // pred_region
    _
  $region13: #{tpu_custom_call.1} parent=0 // pred_fallthru
    _
  // Predicated region
  $region14: #{tpu_custom_call.1} parent=0 // pred_check
    _
  $region15: #{tpu_custom_call.1} parent=0 // pred_check_branch
    %17 = sbr.rel (0) target = $region17
  $region16: #{tpu_custom_call.1} parent=0 // pred_region
    _
  $region17: #{tpu_custom_call.1} parent=0 // pred_fallthru
    _
  // Predicated region
  $region18: #{tpu_custom_call.1} parent=0 // pred_check
    _
  $region19: #{tpu_custom_call.1} parent=0 // pred_check_branch
    %19 = sbr.rel (0) target = $region21
  $region20: #{tpu_custom_call.1} parent=0 // pred_region
    _
  $region21: #{tpu_custom_call.1} parent=0 // pred_fallthru
    _
  %v20 = vld [vmem:[%s0] sm:$0xff]
  %v21 = vld [vmem:[%s0 + $0x8] sm:$0xff]
  %v22 = vld [vmem:[%s0 + $0x10] sm:$0xff]
  %v23 = vld [vmem:[%s0 + $0x18] sm:$0xff]
  %v24 = vld [vmem:[%s0 + $0x20] sm:$0xff]
  %v25 = vld [vmem:[%s0 + $0x28] sm:$0xff]
  %v26 = vld [vmem:[%s0 + $0x30] sm:$0xff]
  %v27 = vld [vmem:[%s0 + $0x38] sm:$0xff]
  %v28 = vld [vmem:[%s1] sm:$0xff]
  %v29 = vld [vmem:[%s1 + $0x8] sm:$0xff]
  %v30 = vld [vmem:[%s1 + $0x10] sm:$0xff]
  %v31 = vld [vmem:[%s1 + $0x18] sm:$0xff]
  %v32 = vld [vmem:[%s2] sm:$0xff]
  %v33 = vperm.slane %v32, 0
  %vm34 = vcmask 261120
  %v36 = vsel %vm34, %v20, 0
  %v39 = vsel %vm34, %v21, 0
  %v42 = vsel %vm34, %v22, 0
  %v45 = vsel %vm34, %v23, 0
  %v48 = vsel %vm34, %v24, 0
  %v51 = vsel %vm34, %v25, 0
  %v54 = vsel %vm34, %v26, 0
  %v57 = vsel %vm34, %v27, 0
  %59 = vmatpush.msra.mxu0 0.0
  %60 = vmatpush.msra.mxu0 0.0
  %61 = vmatpush.msra.mxu0 0.0
  %62 = vmatpush.msra.mxu0 0.0
  %63 = vmatpush.msra.mxu0 0.0
  %64 = vmatpush.msra.mxu0 0.0
  %65 = vmatpush.msra.mxu0 0.0
  %66 = vmatpush.msra.mxu0 0.0
  %67 = vmatpush.msra.mxu0 0.0
  %68 = vmatpush.msra.mxu0 0.0
  %69 = vmatpush.msra.mxu0 0.0
  %70 = vmatpush.msra.mxu0 0.0
  %71 = vmatpush.msra.mxu0 %v31
  %72 = vmatpush.msra.mxu0 %v30
  %73 = vmatpush.msra.mxu0 %v29
  %74 = vmatpush.msra.mxu0 %v28
  %75 = vmatmul.f32.gmra.mxu0 %v36
  %v76 = vpop.f32.mrf.mxu0
  %v77 = vadd.f32 %v33, %v76
  %78 = vmatmul.f32.gmra.mxu0 %v39
  %v79 = vpop.f32.mrf.mxu0
  %v80 = vadd.f32 %v33, %v79
  %81 = vmatmul.f32.gmra.mxu0 %v42
  %v82 = vpop.f32.mrf.mxu0
  %v83 = vadd.f32 %v33, %v82
  %84 = vmatmul.f32.gmra.mxu0 %v45
  %v85 = vpop.f32.mrf.mxu0
  %v86 = vadd.f32 %v33, %v85
  %87 = vmatmul.f32.gmra.mxu0 %v48
  %v88 = vpop.f32.mrf.mxu0
  %v89 = vadd.f32 %v33, %v88
  %90 = vmatmul.f32.gmra.mxu0 %v51
  %v91 = vpop.f32.mrf.mxu0
  %v92 = vadd.f32 %v33, %v91
  %93 = vmatmul.f32.gmra.mxu0 %v54
  %v94 = vpop.f32.mrf.mxu0
  %v95 = vadd.f32 %v33, %v94
  %96 = vmatmul.f32.gmra.mxu0 %v57
  %v97 = vpop.f32.mrf.mxu0
  %v98 = vadd.f32 %v33, %v97
  %99 = vdwg.mxu0
  %v100 = vmax.f32 %v77, 0.0
  %v101 = vmax.f32 %v80, 0.0
  %v102 = vmax.f32 %v83, 0.0
  %v103 = vmax.f32 %v86, 0.0
  %v104 = vmax.f32 %v89, 0.0
  %v105 = vmax.f32 %v92, 0.0
  %v106 = vmax.f32 %v95, 0.0
  %v107 = vmax.f32 %v98, 0.0
  %vm108 = vcmask 523264
  %v109 = vsel %vm108, %v100, 0.0
  %110 = vadd.xlane.f32.xlu0 %v109
  %v111 = vpop.xlane.xlu0 %110
  %v112 = vsel %vm108, %v101, 0.0
  %113 = vadd.xlane.f32.xlu0 %v112
  %v114 = vpop.xlane.xlu0 %113
  %v115 = vsel %vm108, %v102, 0.0
  %116 = vadd.xlane.f32.xlu0 %v115
  %v117 = vpop.xlane.xlu0 %116
  %v118 = vsel %vm108, %v103, 0.0
  %119 = vadd.xlane.f32.xlu0 %v118
  %v120 = vpop.xlane.xlu0 %119
  %v121 = vsel %vm108, %v104, 0.0
  %122 = vadd.xlane.f32.xlu0 %v121
  %v123 = vpop.xlane.xlu0 %122
  %v124 = vsel %vm108, %v105, 0.0
  %125 = vadd.xlane.f32.xlu0 %v124
  %v126 = vpop.xlane.xlu0 %125
  %v127 = vsel %vm108, %v106, 0.0
  %128 = vadd.xlane.f32.xlu0 %v127
  %v129 = vpop.xlane.xlu0 %128
  %v130 = vsel %vm108, %v107, 0.0
  %131 = vadd.xlane.f32.xlu0 %v130
  %v132 = vpop.xlane.xlu0 %131
  %v133 = vrcp.pop 64.0
  %v134 = vmul.f32 64.0, %v133
  %v135 = vsub.f32 1.0, %v134
  %v136 = vmul.f32 %v133, %v135
  %v137 = vadd.f32 %v133, %v136
  %vm138 = vweird.f32 %v133
  %v139 = vsel %vm138, %v133, %v137
  %v140 = vmul.f32 %v111, %v139
  %v141 = vmul.f32 %v114, %v139
  %v142 = vmul.f32 %v117, %v139
  %v143 = vmul.f32 %v120, %v139
  %v144 = vmul.f32 %v123, %v139
  %v145 = vmul.f32 %v126, %v139
  %v146 = vmul.f32 %v129, %v139
  %v147 = vmul.f32 %v132, %v139
  %v148 = vsub.f32 %v100, %v140
  %v149 = vsub.f32 %v101, %v141
  %v150 = vsub.f32 %v102, %v142
  %v151 = vsub.f32 %v103, %v143
  %v152 = vsub.f32 %v104, %v144
  %v153 = vsub.f32 %v105, %v145
  %v154 = vsub.f32 %v106, %v146
  %v155 = vsub.f32 %v107, %v147
  %v156 = vmul.f32 %v148, %v148
  %v157 = vmul.f32 %v149, %v149
  %v158 = vmul.f32 %v150, %v150
  %v159 = vmul.f32 %v151, %v151
  %v160 = vmul.f32 %v152, %v152
  %v161 = vmul.f32 %v153, %v153
  %v162 = vmul.f32 %v154, %v154
  %v163 = vmul.f32 %v155, %v155
  %v164 = vsel %vm108, %v156, 0.0
  %165 = vadd.xlane.f32.xlu0 %v164
  %v166 = vpop.xlane.xlu0 %165
  %v167 = vsel %vm108, %v157, 0.0
  %168 = vadd.xlane.f32.xlu0 %v167
  %v169 = vpop.xlane.xlu0 %168
  %v170 = vsel %vm108, %v158, 0.0
  %171 = vadd.xlane.f32.xlu0 %v170
  %v172 = vpop.xlane.xlu0 %171
  %v173 = vsel %vm108, %v159, 0.0
  %174 = vadd.xlane.f32.xlu0 %v173
  %v175 = vpop.xlane.xlu0 %174
  %v176 = vsel %vm108, %v160, 0.0
  %177 = vadd.xlane.f32.xlu0 %v176
  %v178 = vpop.xlane.xlu0 %177
  %v179 = vsel %vm108, %v161, 0.0
  %180 = vadd.xlane.f32.xlu0 %v179
  %v181 = vpop.xlane.xlu0 %180
  %v182 = vsel %vm108, %v162, 0.0
  %183 = vadd.xlane.f32.xlu0 %v182
  %v184 = vpop.xlane.xlu0 %183
  %v185 = vsel %vm108, %v163, 0.0
  %186 = vadd.xlane.f32.xlu0 %v185
  %v187 = vpop.xlane.xlu0 %186
  %v188 = vmul.f32 %v166, %v139
  %v189 = vmul.f32 %v169, %v139
  %v190 = vmul.f32 %v172, %v139
  %v191 = vmul.f32 %v175, %v139
  %v192 = vmul.f32 %v178, %v139
  %v193 = vmul.f32 %v181, %v139
  %v194 = vmul.f32 %v184, %v139
  %v195 = vmul.f32 %v187, %v139
  %v196 = vadd.f32 %v188, 1e-05
  %v197 = vadd.f32 %v189, 1e-05
  %v198 = vadd.f32 %v190, 1e-05
  %v199 = vadd.f32 %v191, 1e-05
  %v200 = vadd.f32 %v192, 1e-05
  %v201 = vadd.f32 %v193, 1e-05
  %v202 = vadd.f32 %v194, 1e-05
  %v203 = vadd.f32 %v195, 1e-05
  %v204 = vrsqrt.pop %v196
  %v205 = vmul.f32 %v204, %v196
  %v206 = vmul.f32 %v205, %v204
  %v207 = vmul.f32 0.5, %v206
  %v208 = vsub.f32 1.5, %v207
  %v209 = vmul.f32 %v204, %v208
  %vm210 = vweird.f32 %v196
  %vm211 = vweird.f32 %v204
  %vm212 = vmor %vm210, %vm211
  %v213 = vsel %vm212, %v204, %v209
  %v214 = vrsqrt.pop %v197
  %v215 = vmul.f32 %v214, %v197
  %v216 = vmul.f32 %v215, %v214
  %v217 = vmul.f32 0.5, %v216
  %v218 = vsub.f32 1.5, %v217
  %v219 = vmul.f32 %v214, %v218
  %vm220 = vweird.f32 %v197
  %vm221 = vweird.f32 %v214
  %vm222 = vmor %vm220, %vm221
  %v223 = vsel %vm222, %v214, %v219
  %v224 = vrsqrt.pop %v198
  %v225 = vmul.f32 %v224, %v198
  %v226 = vmul.f32 %v225, %v224
  %v227 = vmul.f32 0.5, %v226
  %v228 = vsub.f32 1.5, %v227
  %v229 = vmul.f32 %v224, %v228
  %vm230 = vweird.f32 %v198
  %vm231 = vweird.f32 %v224
  %vm232 = vmor %vm230, %vm231
  %v233 = vsel %vm232, %v224, %v229
  %v234 = vrsqrt.pop %v199
  %v235 = vmul.f32 %v234, %v199
  %v236 = vmul.f32 %v235, %v234
  %v237 = vmul.f32 0.5, %v236
  %v238 = vsub.f32 1.5, %v237
  %v239 = vmul.f32 %v234, %v238
  %vm240 = vweird.f32 %v199
  %vm241 = vweird.f32 %v234
  %vm242 = vmor %vm240, %vm241
  %v243 = vsel %vm242, %v234, %v239
  %v244 = vrsqrt.pop %v200
  %v245 = vmul.f32 %v244, %v200
  %v246 = vmul.f32 %v245, %v244
  %v247 = vmul.f32 0.5, %v246
  %v248 = vsub.f32 1.5, %v247
  %v249 = vmul.f32 %v244, %v248
  %vm250 = vweird.f32 %v200
  %vm251 = vweird.f32 %v244
  %vm252 = vmor %vm250, %vm251
  %v253 = vsel %vm252, %v244, %v249
  %v254 = vrsqrt.pop %v201
  %v255 = vmul.f32 %v254, %v201
  %v256 = vmul.f32 %v255, %v254
  %v257 = vmul.f32 0.5, %v256
  %v258 = vsub.f32 1.5, %v257
  %v259 = vmul.f32 %v254, %v258
  %vm260 = vweird.f32 %v201
  %vm261 = vweird.f32 %v254
  %vm262 = vmor %vm260, %vm261
  %v263 = vsel %vm262, %v254, %v259
  %v264 = vrsqrt.pop %v202
  %v265 = vmul.f32 %v264, %v202
  %v266 = vmul.f32 %v265, %v264
  %v267 = vmul.f32 0.5, %v266
  %v268 = vsub.f32 1.5, %v267
  %v269 = vmul.f32 %v264, %v268
  %vm270 = vweird.f32 %v202
  %vm271 = vweird.f32 %v264
  %vm272 = vmor %vm270, %vm271
  %v273 = vsel %vm272, %v264, %v269
  %v274 = vrsqrt.pop %v203
  %v275 = vmul.f32 %v274, %v203
  %v276 = vmul.f32 %v275, %v274
  %v277 = vmul.f32 0.5, %v276
  %v278 = vsub.f32 1.5, %v277
  %v279 = vmul.f32 %v274, %v278
  %vm280 = vweird.f32 %v203
  %vm281 = vweird.f32 %v274
  %vm282 = vmor %vm280, %vm281
  %v283 = vsel %vm282, %v274, %v279
  %v284 = vmul.f32 %v148, %v213
  %v285 = vmul.f32 %v149, %v223
  %v286 = vmul.f32 %v150, %v233
  %v287 = vmul.f32 %v151, %v243
  %v288 = vmul.f32 %v152, %v253
  %v289 = vmul.f32 %v153, %v263
  %v290 = vmul.f32 %v154, %v273
  %v291 = vmul.f32 %v155, %v283
  %v292 = vperm.slane %v32, 1
  %v293 = vmul.f32 %v284, %v292
  %v294 = vmul.f32 %v285, %v292
  %v295 = vmul.f32 %v286, %v292
  %v296 = vmul.f32 %v287, %v292
  %v297 = vmul.f32 %v288, %v292
  %v298 = vmul.f32 %v289, %v292
  %v299 = vmul.f32 %v290, %v292
  %v300 = vmul.f32 %v291, %v292
  %v301 = vperm.slane %v32, 2
  %v302 = vadd.f32 %v293, %v301
  %v303 = vadd.f32 %v294, %v301
  %v304 = vadd.f32 %v295, %v301
  %v305 = vadd.f32 %v296, %v301
  %v306 = vadd.f32 %v297, %v301
  %v307 = vadd.f32 %v298, %v301
  %v308 = vadd.f32 %v299, %v301
  %v309 = vadd.f32 %v300, %v301
  %v310 = vld [vmem:[%s3] sm:$0xff]
  %v311 = vld [vmem:[%s3 + $0x8] sm:$0xff]
  %v312 = vld [vmem:[%s3 + $0x10] sm:$0xff]
  %v313 = vld [vmem:[%s3 + $0x18] sm:$0xff]
  %v314 = vld [vmem:[%s3 + $0x20] sm:$0xff]
  %v315 = vld [vmem:[%s3 + $0x28] sm:$0xff]
  %v316 = vld [vmem:[%s3 + $0x30] sm:$0xff]
  %v317 = vld [vmem:[%s3 + $0x38] sm:$0xff]
  %v318 = vld [vmem:[%s4] sm:$0xff]
  %v319 = vperm.slane %v318, 0
  %v321 = vsel %vm108, %v302, 0
  %v324 = vsel %vm108, %v303, 0
  %v327 = vsel %vm108, %v304, 0
  %v330 = vsel %vm108, %v305, 0
  %v333 = vsel %vm108, %v306, 0
  %v336 = vsel %vm108, %v307, 0
  %v339 = vsel %vm108, %v308, 0
  %v342 = vsel %vm108, %v309, 0
  %344 = vmatpush.msra.mxu0 0.0
  %345 = vmatpush.msra.mxu0 0.0
  %346 = vmatpush.msra.mxu0 0.0
  %347 = vmatpush.msra.mxu0 0.0
  %348 = vmatpush.msra.mxu0 0.0
  %349 = vmatpush.msra.mxu0 0.0
  %350 = vmatpush.msra.mxu0 0.0
  %351 = vmatpush.msra.mxu0 0.0
  %352 = vmatpush.msra.mxu0 %v317
  %353 = vmatpush.msra.mxu0 %v316
  %354 = vmatpush.msra.mxu0 %v315
  %355 = vmatpush.msra.mxu0 %v314
  %356 = vmatpush.msra.mxu0 %v313
  %357 = vmatpush.msra.mxu0 %v312
  %358 = vmatpush.msra.mxu0 %v311
  %359 = vmatpush.msra.mxu0 %v310
  %360 = vmatmul.f32.gmra.mxu0 %v321
  %v361 = vpop.f32.mrf.mxu0
  %v362 = vadd.f32 %v319, %v361
  %363 = vmatmul.f32.gmra.mxu0 %v324
  %v364 = vpop.f32.mrf.mxu0
  %v365 = vadd.f32 %v319, %v364
  %366 = vmatmul.f32.gmra.mxu0 %v327
  %v367 = vpop.f32.mrf.mxu0
  %v368 = vadd.f32 %v319, %v367
  %369 = vmatmul.f32.gmra.mxu0 %v330
  %v370 = vpop.f32.mrf.mxu0
  %v371 = vadd.f32 %v319, %v370
  %372 = vmatmul.f32.gmra.mxu0 %v333
  %v373 = vpop.f32.mrf.mxu0
  %v374 = vadd.f32 %v319, %v373
  %375 = vmatmul.f32.gmra.mxu0 %v336
  %v376 = vpop.f32.mrf.mxu0
  %v377 = vadd.f32 %v319, %v376
  %378 = vmatmul.f32.gmra.mxu0 %v339
  %v379 = vpop.f32.mrf.mxu0
  %v380 = vadd.f32 %v319, %v379
  %381 = vmatmul.f32.gmra.mxu0 %v342
  %v382 = vpop.f32.mrf.mxu0
  %v383 = vadd.f32 %v319, %v382
  %384 = vdwg.mxu0
  %v385 = vmax.f32 %v362, 0.0
  %v386 = vmax.f32 %v365, 0.0
  %v387 = vmax.f32 %v368, 0.0
  %v388 = vmax.f32 %v371, 0.0
  %v389 = vmax.f32 %v374, 0.0
  %v390 = vmax.f32 %v377, 0.0
  %v391 = vmax.f32 %v380, 0.0
  %v392 = vmax.f32 %v383, 0.0
  %v393 = vsel %vm34, %v385, 0.0
  %394 = vadd.xlane.f32.xlu0 %v393
  %v395 = vpop.xlane.xlu0 %394
  %v396 = vsel %vm34, %v386, 0.0
  %397 = vadd.xlane.f32.xlu0 %v396
  %v398 = vpop.xlane.xlu0 %397
  %v399 = vsel %vm34, %v387, 0.0
  %400 = vadd.xlane.f32.xlu0 %v399
  %v401 = vpop.xlane.xlu0 %400
  %v402 = vsel %vm34, %v388, 0.0
  %403 = vadd.xlane.f32.xlu0 %v402
  %v404 = vpop.xlane.xlu0 %403
  %v405 = vsel %vm34, %v389, 0.0
  %406 = vadd.xlane.f32.xlu0 %v405
  %v407 = vpop.xlane.xlu0 %406
  %v408 = vsel %vm34, %v390, 0.0
  %409 = vadd.xlane.f32.xlu0 %v408
  %v410 = vpop.xlane.xlu0 %409
  %v411 = vsel %vm34, %v391, 0.0
  %412 = vadd.xlane.f32.xlu0 %v411
  %v413 = vpop.xlane.xlu0 %412
  %v414 = vsel %vm34, %v392, 0.0
  %415 = vadd.xlane.f32.xlu0 %v414
  %v416 = vpop.xlane.xlu0 %415
  %v417 = vrcp.pop 32.0
  %v418 = vmul.f32 32.0, %v417
  %v419 = vsub.f32 1.0, %v418
  %v420 = vmul.f32 %v417, %v419
  %v421 = vadd.f32 %v417, %v420
  %vm422 = vweird.f32 %v417
  %v423 = vsel %vm422, %v417, %v421
  %v424 = vmul.f32 %v395, %v423
  %v425 = vmul.f32 %v398, %v423
  %v426 = vmul.f32 %v401, %v423
  %v427 = vmul.f32 %v404, %v423
  %v428 = vmul.f32 %v407, %v423
  %v429 = vmul.f32 %v410, %v423
  %v430 = vmul.f32 %v413, %v423
  %v431 = vmul.f32 %v416, %v423
  %v432 = vsub.f32 %v385, %v424
  %v433 = vsub.f32 %v386, %v425
  %v434 = vsub.f32 %v387, %v426
  %v435 = vsub.f32 %v388, %v427
  %v436 = vsub.f32 %v389, %v428
  %v437 = vsub.f32 %v390, %v429
  %v438 = vsub.f32 %v391, %v430
  %v439 = vsub.f32 %v392, %v431
  %v440 = vmul.f32 %v432, %v432
  %v441 = vmul.f32 %v433, %v433
  %v442 = vmul.f32 %v434, %v434
  %v443 = vmul.f32 %v435, %v435
  %v444 = vmul.f32 %v436, %v436
  %v445 = vmul.f32 %v437, %v437
  %v446 = vmul.f32 %v438, %v438
  %v447 = vmul.f32 %v439, %v439
  %v448 = vsel %vm34, %v440, 0.0
  %449 = vadd.xlane.f32.xlu0 %v448
  %v450 = vpop.xlane.xlu0 %449
  %v451 = vsel %vm34, %v441, 0.0
  %452 = vadd.xlane.f32.xlu0 %v451
  %v453 = vpop.xlane.xlu0 %452
  %v454 = vsel %vm34, %v442, 0.0
  %455 = vadd.xlane.f32.xlu0 %v454
  %v456 = vpop.xlane.xlu0 %455
  %v457 = vsel %vm34, %v443, 0.0
  %458 = vadd.xlane.f32.xlu0 %v457
  %v459 = vpop.xlane.xlu0 %458
  %v460 = vsel %vm34, %v444, 0.0
  %461 = vadd.xlane.f32.xlu0 %v460
  %v462 = vpop.xlane.xlu0 %461
  %v463 = vsel %vm34, %v445, 0.0
  %464 = vadd.xlane.f32.xlu0 %v463
  %v465 = vpop.xlane.xlu0 %464
  %v466 = vsel %vm34, %v446, 0.0
  %467 = vadd.xlane.f32.xlu0 %v466
  %v468 = vpop.xlane.xlu0 %467
  %v469 = vsel %vm34, %v447, 0.0
  %470 = vadd.xlane.f32.xlu0 %v469
  %v471 = vpop.xlane.xlu0 %470
  %v472 = vmul.f32 %v450, %v423
  %v473 = vmul.f32 %v453, %v423
  %v474 = vmul.f32 %v456, %v423
  %v475 = vmul.f32 %v459, %v423
  %v476 = vmul.f32 %v462, %v423
  %v477 = vmul.f32 %v465, %v423
  %v478 = vmul.f32 %v468, %v423
  %v479 = vmul.f32 %v471, %v423
  %v480 = vadd.f32 %v472, 1e-05
  %v481 = vadd.f32 %v473, 1e-05
  %v482 = vadd.f32 %v474, 1e-05
  %v483 = vadd.f32 %v475, 1e-05
  %v484 = vadd.f32 %v476, 1e-05
  %v485 = vadd.f32 %v477, 1e-05
  %v486 = vadd.f32 %v478, 1e-05
  %v487 = vadd.f32 %v479, 1e-05
  %v488 = vrsqrt.pop %v480
  %v489 = vmul.f32 %v488, %v480
  %v490 = vmul.f32 %v489, %v488
  %v491 = vmul.f32 0.5, %v490
  %v492 = vsub.f32 1.5, %v491
  %v493 = vmul.f32 %v488, %v492
  %vm494 = vweird.f32 %v480
  %vm495 = vweird.f32 %v488
  %vm496 = vmor %vm494, %vm495
  %v497 = vsel %vm496, %v488, %v493
  %v498 = vrsqrt.pop %v481
  %v499 = vmul.f32 %v498, %v481
  %v500 = vmul.f32 %v499, %v498
  %v501 = vmul.f32 0.5, %v500
  %v502 = vsub.f32 1.5, %v501
  %v503 = vmul.f32 %v498, %v502
  %vm504 = vweird.f32 %v481
  %vm505 = vweird.f32 %v498
  %vm506 = vmor %vm504, %vm505
  %v507 = vsel %vm506, %v498, %v503
  %v508 = vrsqrt.pop %v482
  %v509 = vmul.f32 %v508, %v482
  %v510 = vmul.f32 %v509, %v508
  %v511 = vmul.f32 0.5, %v510
  %v512 = vsub.f32 1.5, %v511
  %v513 = vmul.f32 %v508, %v512
  %vm514 = vweird.f32 %v482
  %vm515 = vweird.f32 %v508
  %vm516 = vmor %vm514, %vm515
  %v517 = vsel %vm516, %v508, %v513
  %v518 = vrsqrt.pop %v483
  %v519 = vmul.f32 %v518, %v483
  %v520 = vmul.f32 %v519, %v518
  %v521 = vmul.f32 0.5, %v520
  %v522 = vsub.f32 1.5, %v521
  %v523 = vmul.f32 %v518, %v522
  %vm524 = vweird.f32 %v483
  %vm525 = vweird.f32 %v518
  %vm526 = vmor %vm524, %vm525
  %v527 = vsel %vm526, %v518, %v523
  %v528 = vrsqrt.pop %v484
  %v529 = vmul.f32 %v528, %v484
  %v530 = vmul.f32 %v529, %v528
  %v531 = vmul.f32 0.5, %v530
  %v532 = vsub.f32 1.5, %v531
  %v533 = vmul.f32 %v528, %v532
  %vm534 = vweird.f32 %v484
  %vm535 = vweird.f32 %v528
  %vm536 = vmor %vm534, %vm535
  %v537 = vsel %vm536, %v528, %v533
  %v538 = vrsqrt.pop %v485
  %v539 = vmul.f32 %v538, %v485
  %v540 = vmul.f32 %v539, %v538
  %v541 = vmul.f32 0.5, %v540
  %v542 = vsub.f32 1.5, %v541
  %v543 = vmul.f32 %v538, %v542
  %vm544 = vweird.f32 %v485
  %vm545 = vweird.f32 %v538
  %vm546 = vmor %vm544, %vm545
  %v547 = vsel %vm546, %v538, %v543
  %v548 = vrsqrt.pop %v486
  %v549 = vmul.f32 %v548, %v486
  %v550 = vmul.f32 %v549, %v548
  %v551 = vmul.f32 0.5, %v550
  %v552 = vsub.f32 1.5, %v551
  %v553 = vmul.f32 %v548, %v552
  %vm554 = vweird.f32 %v486
  %vm555 = vweird.f32 %v548
  %vm556 = vmor %vm554, %vm555
  %v557 = vsel %vm556, %v548, %v553
  %v558 = vrsqrt.pop %v487
  %v559 = vmul.f32 %v558, %v487
  %v560 = vmul.f32 %v559, %v558
  %v561 = vmul.f32 0.5, %v560
  %v562 = vsub.f32 1.5, %v561
  %v563 = vmul.f32 %v558, %v562
  %vm564 = vweird.f32 %v487
  %vm565 = vweird.f32 %v558
  %vm566 = vmor %vm564, %vm565
  %v567 = vsel %vm566, %v558, %v563
  %v568 = vmul.f32 %v432, %v497
  %v569 = vmul.f32 %v433, %v507
  %v570 = vmul.f32 %v434, %v517
  %v571 = vmul.f32 %v435, %v527
  %v572 = vmul.f32 %v436, %v537
  %v573 = vmul.f32 %v437, %v547
  %v574 = vmul.f32 %v438, %v557
  %v575 = vmul.f32 %v439, %v567
  %v576 = vperm.slane %v318, 1
  %v577 = vmul.f32 %v568, %v576
  %v578 = vmul.f32 %v569, %v576
  %v579 = vmul.f32 %v570, %v576
  %v580 = vmul.f32 %v571, %v576
  %v581 = vmul.f32 %v572, %v576
  %v582 = vmul.f32 %v573, %v576
  %v583 = vmul.f32 %v574, %v576
  %v584 = vmul.f32 %v575, %v576
  %v585 = vperm.slane %v318, 2
  %v586 = vadd.f32 %v577, %v585
  %v587 = vadd.f32 %v578, %v585
  %v588 = vadd.f32 %v579, %v585
  %v589 = vadd.f32 %v580, %v585
  %v590 = vadd.f32 %v581, %v585
  %v591 = vadd.f32 %v582, %v585
  %v592 = vadd.f32 %v583, %v585
  %v593 = vadd.f32 %v584, %v585
  %594 = vst.msk [vmem:[%s5] sm:$0xff] %vm34, %v586
  %595 = vst.msk [vmem:[%s5 + $0x8] sm:$0xff] %vm34, %v587
  %596 = vst.msk [vmem:[%s5 + $0x10] sm:$0xff] %vm34, %v588
  %597 = vst.msk [vmem:[%s5 + $0x18] sm:$0xff] %vm34, %v589
  %598 = vst.msk [vmem:[%s5 + $0x20] sm:$0xff] %vm34, %v590
  %599 = vst.msk [vmem:[%s5 + $0x28] sm:$0xff] %vm34, %v591
  %600 = vst.msk [vmem:[%s5 + $0x30] sm:$0xff] %vm34, %v592
  %601 = vst.msk [vmem:[%s5 + $0x38] sm:$0xff] %vm34, %v593
  // Predicated region
  $region22: #{tpu_custom_call.1} parent=0 // pred_check
    _
  $region23: #{tpu_custom_call.1} parent=0 // pred_check_branch
    %603 = sbr.rel (0) target = $region25
  $region24: #{tpu_custom_call.1} parent=0 // pred_region
    _
  $region25: #{tpu_custom_call.1} parent=0 // pred_fallthru
    _
  // Predicated region
  $region26: #{tpu_custom_call.1} parent=0 // pred_check
    _
  $region27: #{tpu_custom_call.1} parent=0 // pred_check_branch
    %605 = sbr.rel (0) target = $region29
  $region28: #{tpu_custom_call.1} parent=0 // pred_region
    _
  $region29: #{tpu_custom_call.1} parent=0 // pred_fallthru
    _

// kernel: tpu_custom_call.1
$region0: #{tpu_custom_call.1}
  #allocation0 [shape = 'u32[]', space=smem, size = 0x4, offset = 0x4, fixed_abs, tag = 'smem constant byte address 0x4 - core index']
  #allocation1 [shape = 'u32[72,128]{1,0:T(1,128)}', space=vmem, size = 0x9000, scoped, tag = 'internal scratch']
  %s0 = inlined_call_operand.vmem [shape: f32[64,32], index: 0, kind: input, shape index: {}]
  %s1 = inlined_call_operand.vmem [shape: f32[32,64], index: 1, kind: input, shape index: {}]
  %s2 = inlined_call_operand.vmem [shape: f32[8,64], index: 2, kind: input, shape index: {}]
  %s3 = inlined_call_operand.vmem [shape: f32[64,32], index: 3, kind: input, shape index: {}]
  %s4 = inlined_call_operand.vmem [shape: f32[8,32], index: 4, kind: input, shape index: {}]
  %s5 = inlined_call_operand.vmem [shape: f32[64,32], index: 5, kind: output, shape index: {}]
  %s6 = sld [smem:[#allocation0]]
  $region30: #{tpu_custom_call.1} parent=0
    _
  %s8 = ssub.s32 1, %s6
  %s9 = scalar_select 0, %s8, %s6
  // Predicated region
  $region2: #{tpu_custom_call.1} parent=0 // pred_check
    _
  $region3: #{tpu_custom_call.1} parent=0 // pred_check_branch
    %11 = sbr.rel (0) target = $region5
  $region4: #{tpu_custom_call.1} parent=0 // pred_region
    _
  $region5: #{tpu_custom_call.1} parent=0 // pred_fallthru
    _
  // Predicated region
  $region6: #{tpu_custom_call.1} parent=0 // pred_check
    _
  $region7: #{tpu_custom_call.1} parent=0 // pred_check_branch
    %13 = sbr.rel (0) target = $region9
  $region8: #{tpu_custom_call.1} parent=0 // pred_region
    _
  $region9: #{tpu_custom_call.1} parent=0 // pred_fallthru
    _
  // Predicated region
  $region10: #{tpu_custom_call.1} parent=0 // pred_check
    _
  $region11: #{tpu_custom_call.1} parent=0 // pred_check_branch
    %15 = sbr.rel (0) target = $region13
  $region12: #{tpu_custom_call.1} parent=0 // pred_region
    _
  $region13: #{tpu_custom_call.1} parent=0 // pred_fallthru
    _
  // Predicated region
  $region14: #{tpu_custom_call.1} parent=0 // pred_check
    _
  $region15: #{tpu_custom_call.1} parent=0 // pred_check_branch
    %17 = sbr.rel (0) target = $region17
  $region16: #{tpu_custom_call.1} parent=0 // pred_region
    _
  $region17: #{tpu_custom_call.1} parent=0 // pred_fallthru
    _
  // Predicated region
  $region18: #{tpu_custom_call.1} parent=0 // pred_check
    _
  $region19: #{tpu_custom_call.1} parent=0 // pred_check_branch
    %19 = sbr.rel (0) target = $region21
  $region20: #{tpu_custom_call.1} parent=0 // pred_region
    _
  $region21: #{tpu_custom_call.1} parent=0 // pred_fallthru
    _
  %v20 = vld [vmem:[%s0] sm:$0xff]
  %v21 = vld [vmem:[%s0 + $0x8] sm:$0xff]
  %v22 = vld [vmem:[%s0 + $0x10] sm:$0xff]
  %v23 = vld [vmem:[%s0 + $0x18] sm:$0xff]
  %v24 = vld [vmem:[%s0 + $0x20] sm:$0xff]
  %v25 = vld [vmem:[%s0 + $0x28] sm:$0xff]
  %v26 = vld [vmem:[%s0 + $0x30] sm:$0xff]
  %v27 = vld [vmem:[%s0 + $0x38] sm:$0xff]
  %v28 = vld [vmem:[%s1] sm:$0xff]
  %v29 = vld [vmem:[%s1 + $0x8] sm:$0xff]
  %v30 = vld [vmem:[%s1 + $0x10] sm:$0xff]
  %v31 = vld [vmem:[%s1 + $0x18] sm:$0xff]
  %v32 = vld [vmem:[%s2] sm:$0xff]
  %v33 = vperm.slane %v32, 0
  %vm34 = vcmask 261120
  %v36 = vsel %vm34, %v20, 0
  %v39 = vsel %vm34, %v21, 0
  %v42 = vsel %vm34, %v22, 0
  %v45 = vsel %vm34, %v23, 0
  %v48 = vsel %vm34, %v24, 0
  %v51 = vsel %vm34, %v25, 0
  %v54 = vsel %vm34, %v26, 0
  %v57 = vsel %vm34, %v27, 0
  %59 = vmatpush.msra.mxu0 0.0
  %60 = vmatpush.msra.mxu0 0.0
  %61 = vmatpush.msra.mxu0 0.0
  %62 = vmatpush.msra.mxu0 0.0
  %63 = vmatpush.msra.mxu0 0.0
  %64 = vmatpush.msra.mxu0 0.0
  %65 = vmatpush.msra.mxu0 0.0
  %66 = vmatpush.msra.mxu0 0.0
  %67 = vmatpush.msra.mxu0 0.0
  %68 = vmatpush.msra.mxu0 0.0
  %69 = vmatpush.msra.mxu0 0.0
  %70 = vmatpush.msra.mxu0 0.0
  %71 = vmatpush.msra.mxu0 %v31
  %72 = vmatpush.msra.mxu0 %v30
  %73 = vmatpush.msra.mxu0 %v29
  %74 = vmatpush.msra.mxu0 %v28
  %75 = vmatmul.f32.gmra.mxu0 %v36
  %v76 = vpop.f32.mrf.mxu0
  %v77 = vadd.f32 %v33, %v76
  %78 = vmatmul.f32.gmra.mxu0 %v39
  %v79 = vpop.f32.mrf.mxu0
  %v80 = vadd.f32 %v33, %v79
  %81 = vmatmul.f32.gmra.mxu0 %v42
  %v82 = vpop.f32.mrf.mxu0
  %v83 = vadd.f32 %v33, %v82
  %84 = vmatmul.f32.gmra.mxu0 %v45
  %v85 = vpop.f32.mrf.mxu0
  %v86 = vadd.f32 %v33, %v85
  %87 = vmatmul.f32.gmra.mxu0 %v48
  %v88 = vpop.f32.mrf.mxu0
  %v89 = vadd.f32 %v33, %v88
  %90 = vmatmul.f32.gmra.mxu0 %v51
  %v91 = vpop.f32.mrf.mxu0
  %v92 = vadd.f32 %v33, %v91
  %93 = vmatmul.f32.gmra.mxu0 %v54
  %v94 = vpop.f32.mrf.mxu0
  %v95 = vadd.f32 %v33, %v94
  %96 = vmatmul.f32.gmra.mxu0 %v57
  %v97 = vpop.f32.mrf.mxu0
  %v98 = vadd.f32 %v33, %v97
  %99 = vdwg.mxu0
  %v100 = vmax.f32 %v77, 0.0
  %v101 = vmax.f32 %v80, 0.0
  %v102 = vmax.f32 %v83, 0.0
  %v103 = vmax.f32 %v86, 0.0
  %v104 = vmax.f32 %v89, 0.0
  %v105 = vmax.f32 %v92, 0.0
  %v106 = vmax.f32 %v95, 0.0
  %v107 = vmax.f32 %v98, 0.0
  %vm108 = vcmask 523264
  %v109 = vsel %vm108, %v100, 0.0
  %110 = vadd.xlane.f32.xlu0 %v109
  %v111 = vpop.xlane.xlu0 %110
  %v112 = vsel %vm108, %v101, 0.0
  %113 = vadd.xlane.f32.xlu0 %v112
  %v114 = vpop.xlane.xlu0 %113
  %v115 = vsel %vm108, %v102, 0.0
  %116 = vadd.xlane.f32.xlu0 %v115
  %v117 = vpop.xlane.xlu0 %116
  %v118 = vsel %vm108, %v103, 0.0
  %119 = vadd.xlane.f32.xlu0 %v118
  %v120 = vpop.xlane.xlu0 %119
  %v121 = vsel %vm108, %v104, 0.0
  %122 = vadd.xlane.f32.xlu0 %v121
  %v123 = vpop.xlane.xlu0 %122
  %v124 = vsel %vm108, %v105, 0.0
  %125 = vadd.xlane.f32.xlu0 %v124
  %v126 = vpop.xlane.xlu0 %125
  %v127 = vsel %vm108, %v106, 0.0
  %128 = vadd.xlane.f32.xlu0 %v127
  %v129 = vpop.xlane.xlu0 %128
  %v130 = vsel %vm108, %v107, 0.0
  %131 = vadd.xlane.f32.xlu0 %v130
  %v132 = vpop.xlane.xlu0 %131
  %v133 = vrcp.pop 64.0
  %v134 = vmul.f32 64.0, %v133
  %v135 = vsub.f32 1.0, %v134
  %v136 = vmul.f32 %v133, %v135
  %v137 = vadd.f32 %v133, %v136
  %vm138 = vweird.f32 %v133
  %v139 = vsel %vm138, %v133, %v137
  %v140 = vmul.f32 %v111, %v139
  %v141 = vmul.f32 %v114, %v139
  %v142 = vmul.f32 %v117, %v139
  %v143 = vmul.f32 %v120, %v139
  %v144 = vmul.f32 %v123, %v139
  %v145 = vmul.f32 %v126, %v139
  %v146 = vmul.f32 %v129, %v139
  %v147 = vmul.f32 %v132, %v139
  %v148 = vsub.f32 %v100, %v140
  %v149 = vsub.f32 %v101, %v141
  %v150 = vsub.f32 %v102, %v142
  %v151 = vsub.f32 %v103, %v143
  %v152 = vsub.f32 %v104, %v144
  %v153 = vsub.f32 %v105, %v145
  %v154 = vsub.f32 %v106, %v146
  %v155 = vsub.f32 %v107, %v147
  %v156 = vmul.f32 %v148, %v148
  %v157 = vmul.f32 %v149, %v149
  %v158 = vmul.f32 %v150, %v150
  %v159 = vmul.f32 %v151, %v151
  %v160 = vmul.f32 %v152, %v152
  %v161 = vmul.f32 %v153, %v153
  %v162 = vmul.f32 %v154, %v154
  %v163 = vmul.f32 %v155, %v155
  %v164 = vsel %vm108, %v156, 0.0
  %165 = vadd.xlane.f32.xlu0 %v164
  %v166 = vpop.xlane.xlu0 %165
  %v167 = vsel %vm108, %v157, 0.0
  %168 = vadd.xlane.f32.xlu0 %v167
  %v169 = vpop.xlane.xlu0 %168
  %v170 = vsel %vm108, %v158, 0.0
  %171 = vadd.xlane.f32.xlu0 %v170
  %v172 = vpop.xlane.xlu0 %171
  %v173 = vsel %vm108, %v159, 0.0
  %174 = vadd.xlane.f32.xlu0 %v173
  %v175 = vpop.xlane.xlu0 %174
  %v176 = vsel %vm108, %v160, 0.0
  %177 = vadd.xlane.f32.xlu0 %v176
  %v178 = vpop.xlane.xlu0 %177
  %v179 = vsel %vm108, %v161, 0.0
  %180 = vadd.xlane.f32.xlu0 %v179
  %v181 = vpop.xlane.xlu0 %180
  %v182 = vsel %vm108, %v162, 0.0
  %183 = vadd.xlane.f32.xlu0 %v182
  %v184 = vpop.xlane.xlu0 %183
  %v185 = vsel %vm108, %v163, 0.0
  %186 = vadd.xlane.f32.xlu0 %v185
  %v187 = vpop.xlane.xlu0 %186
  %v188 = vmul.f32 %v166, %v139
  %v189 = vmul.f32 %v169, %v139
  %v190 = vmul.f32 %v172, %v139
  %v191 = vmul.f32 %v175, %v139
  %v192 = vmul.f32 %v178, %v139
  %v193 = vmul.f32 %v181, %v139
  %v194 = vmul.f32 %v184, %v139
  %v195 = vmul.f32 %v187, %v139
  %v196 = vadd.f32 %v188, 1e-05
  %v197 = vadd.f32 %v189, 1e-05
  %v198 = vadd.f32 %v190, 1e-05
  %v199 = vadd.f32 %v191, 1e-05
  %v200 = vadd.f32 %v192, 1e-05
  %v201 = vadd.f32 %v193, 1e-05
  %v202 = vadd.f32 %v194, 1e-05
  %v203 = vadd.f32 %v195, 1e-05
  %v204 = vrsqrt.pop %v196
  %v205 = vmul.f32 %v204, %v196
  %v206 = vmul.f32 %v205, %v204
  %v207 = vmul.f32 0.5, %v206
  %v208 = vsub.f32 1.5, %v207
  %v209 = vmul.f32 %v204, %v208
  %vm210 = vweird.f32 %v196
  %vm211 = vweird.f32 %v204
  %vm212 = vmor %vm210, %vm211
  %v213 = vsel %vm212, %v204, %v209
  %v214 = vrsqrt.pop %v197
  %v215 = vmul.f32 %v214, %v197
  %v216 = vmul.f32 %v215, %v214
  %v217 = vmul.f32 0.5, %v216
  %v218 = vsub.f32 1.5, %v217
  %v219 = vmul.f32 %v214, %v218
  %vm220 = vweird.f32 %v197
  %vm221 = vweird.f32 %v214
  %vm222 = vmor %vm220, %vm221
  %v223 = vsel %vm222, %v214, %v219
  %v224 = vrsqrt.pop %v198
  %v225 = vmul.f32 %v224, %v198
  %v226 = vmul.f32 %v225, %v224
  %v227 = vmul.f32 0.5, %v226
  %v228 = vsub.f32 1.5, %v227
  %v229 = vmul.f32 %v224, %v228
  %vm230 = vweird.f32 %v198
  %vm231 = vweird.f32 %v224
  %vm232 = vmor %vm230, %vm231
  %v233 = vsel %vm232, %v224, %v229
  %v234 = vrsqrt.pop %v199
  %v235 = vmul.f32 %v234, %v199
  %v236 = vmul.f32 %v235, %v234
  %v237 = vmul.f32 0.5, %v236
  %v238 = vsub.f32 1.5, %v237
  %v239 = vmul.f32 %v234, %v238
  %vm240 = vweird.f32 %v199
  %vm241 = vweird.f32 %v234
  %vm242 = vmor %vm240, %vm241
  %v243 = vsel %vm242, %v234, %v239
  %v244 = vrsqrt.pop %v200
  %v245 = vmul.f32 %v244, %v200
  %v246 = vmul.f32 %v245, %v244
  %v247 = vmul.f32 0.5, %v246
  %v248 = vsub.f32 1.5, %v247
  %v249 = vmul.f32 %v244, %v248
  %vm250 = vweird.f32 %v200
  %vm251 = vweird.f32 %v244
  %vm252 = vmor %vm250, %vm251
  %v253 = vsel %vm252, %v244, %v249
  %v254 = vrsqrt.pop %v201
  %v255 = vmul.f32 %v254, %v201
  %v256 = vmul.f32 %v255, %v254
  %v257 = vmul.f32 0.5, %v256
  %v258 = vsub.f32 1.5, %v257
  %v259 = vmul.f32 %v254, %v258
  %vm260 = vweird.f32 %v201
  %vm261 = vweird.f32 %v254
  %vm262 = vmor %vm260, %vm261
  %v263 = vsel %vm262, %v254, %v259
  %v264 = vrsqrt.pop %v202
  %v265 = vmul.f32 %v264, %v202
  %v266 = vmul.f32 %v265, %v264
  %v267 = vmul.f32 0.5, %v266
  %v268 = vsub.f32 1.5, %v267
  %v269 = vmul.f32 %v264, %v268
  %vm270 = vweird.f32 %v202
  %vm271 = vweird.f32 %v264
  %vm272 = vmor %vm270, %vm271
  %v273 = vsel %vm272, %v264, %v269
  %v274 = vrsqrt.pop %v203
  %v275 = vmul.f32 %v274, %v203
  %v276 = vmul.f32 %v275, %v274
  %v277 = vmul.f32 0.5, %v276
  %v278 = vsub.f32 1.5, %v277
  %v279 = vmul.f32 %v274, %v278
  %vm280 = vweird.f32 %v203
  %vm281 = vweird.f32 %v274
  %vm282 = vmor %vm280, %vm281
  %v283 = vsel %vm282, %v274, %v279
  %v284 = vmul.f32 %v148, %v213
  %v285 = vmul.f32 %v149, %v223
  %v286 = vmul.f32 %v150, %v233
  %v287 = vmul.f32 %v151, %v243
  %v288 = vmul.f32 %v152, %v253
  %v289 = vmul.f32 %v153, %v263
  %v290 = vmul.f32 %v154, %v273
  %v291 = vmul.f32 %v155, %v283
  %v292 = vperm.slane %v32, 1
  %v293 = vmul.f32 %v284, %v292
  %v294 = vmul.f32 %v285, %v292
  %v295 = vmul.f32 %v286, %v292
  %v296 = vmul.f32 %v287, %v292
  %v297 = vmul.f32 %v288, %v292
  %v298 = vmul.f32 %v289, %v292
  %v299 = vmul.f32 %v290, %v292
  %v300 = vmul.f32 %v291, %v292
  %v301 = vperm.slane %v32, 2
  %v302 = vadd.f32 %v293, %v301
  %v303 = vadd.f32 %v294, %v301
  %v304 = vadd.f32 %v295, %v301
  %v305 = vadd.f32 %v296, %v301
  %v306 = vadd.f32 %v297, %v301
  %v307 = vadd.f32 %v298, %v301
  %v308 = vadd.f32 %v299, %v301
  %v309 = vadd.f32 %v300, %v301
  %v310 = vld [vmem:[%s3] sm:$0xff]
  %v311 = vld [vmem:[%s3 + $0x8] sm:$0xff]
  %v312 = vld [vmem:[%s3 + $0x10] sm:$0xff]
  %v313 = vld [vmem:[%s3 + $0x18] sm:$0xff]
  %v314 = vld [vmem:[%s3 + $0x20] sm:$0xff]
  %v315 = vld [vmem:[%s3 + $0x28] sm:$0xff]
  %v316 = vld [vmem:[%s3 + $0x30] sm:$0xff]
  %v317 = vld [vmem:[%s3 + $0x38] sm:$0xff]
  %v318 = vld [vmem:[%s4] sm:$0xff]
  %v319 = vperm.slane %v318, 0
  %v321 = vsel %vm108, %v302, 0
  %v324 = vsel %vm108, %v303, 0
  %v327 = vsel %vm108, %v304, 0
  %v330 = vsel %vm108, %v305, 0
  %v333 = vsel %vm108, %v306, 0
  %v336 = vsel %vm108, %v307, 0
  %v339 = vsel %vm108, %v308, 0
  %v342 = vsel %vm108, %v309, 0
  %344 = vmatpush.msra.mxu0 0.0
  %345 = vmatpush.msra.mxu0 0.0
  %346 = vmatpush.msra.mxu0 0.0
  %347 = vmatpush.msra.mxu0 0.0
  %348 = vmatpush.msra.mxu0 0.0
  %349 = vmatpush.msra.mxu0 0.0
  %350 = vmatpush.msra.mxu0 0.0
  %351 = vmatpush.msra.mxu0 0.0
  %352 = vmatpush.msra.mxu0 %v317
  %353 = vmatpush.msra.mxu0 %v316
  %354 = vmatpush.msra.mxu0 %v315
  %355 = vmatpush.msra.mxu0 %v314
  %356 = vmatpush.msra.mxu0 %v313
  %357 = vmatpush.msra.mxu0 %v312
  %358 = vmatpush.msra.mxu0 %v311
  %359 = vmatpush.msra.mxu0 %v310
  %360 = vmatmul.f32.gmra.mxu0 %v321
  %v361 = vpop.f32.mrf.mxu0
  %v362 = vadd.f32 %v319, %v361
  %363 = vmatmul.f32.gmra.mxu0 %v324
  %v364 = vpop.f32.mrf.mxu0
  %v365 = vadd.f32 %v319, %v364
  %366 = vmatmul.f32.gmra.mxu0 %v327
  %v367 = vpop.f32.mrf.mxu0
  %v368 = vadd.f32 %v319, %v367
  %369 = vmatmul.f32.gmra.mxu0 %v330
  %v370 = vpop.f32.mrf.mxu0
  %v371 = vadd.f32 %v319, %v370
  %372 = vmatmul.f32.gmra.mxu0 %v333
  %v373 = vpop.f32.mrf.mxu0
  %v374 = vadd.f32 %v319, %v373
  %375 = vmatmul.f32.gmra.mxu0 %v336
  %v376 = vpop.f32.mrf.mxu0
  %v377 = vadd.f32 %v319, %v376
  %378 = vmatmul.f32.gmra.mxu0 %v339
  %v379 = vpop.f32.mrf.mxu0
  %v380 = vadd.f32 %v319, %v379
  %381 = vmatmul.f32.gmra.mxu0 %v342
  %v382 = vpop.f32.mrf.mxu0
  %v383 = vadd.f32 %v319, %v382
  %384 = vdwg.mxu0
  %v385 = vmax.f32 %v362, 0.0
  %v386 = vmax.f32 %v365, 0.0
  %v387 = vmax.f32 %v368, 0.0
  %v388 = vmax.f32 %v371, 0.0
  %v389 = vmax.f32 %v374, 0.0
  %v390 = vmax.f32 %v377, 0.0
  %v391 = vmax.f32 %v380, 0.0
  %v392 = vmax.f32 %v383, 0.0
  %v393 = vsel %vm34, %v385, 0.0
  %394 = vadd.xlane.f32.xlu0 %v393
  %v395 = vpop.xlane.xlu0 %394
  %v396 = vsel %vm34, %v386, 0.0
  %397 = vadd.xlane.f32.xlu0 %v396
  %v398 = vpop.xlane.xlu0 %397
  %v399 = vsel %vm34, %v387, 0.0
  %400 = vadd.xlane.f32.xlu0 %v399
  %v401 = vpop.xlane.xlu0 %400
  %v402 = vsel %vm34, %v388, 0.0
  %403 = vadd.xlane.f32.xlu0 %v402
  %v404 = vpop.xlane.xlu0 %403
  %v405 = vsel %vm34, %v389, 0.0
  %406 = vadd.xlane.f32.xlu0 %v405
  %v407 = vpop.xlane.xlu0 %406
  %v408 = vsel %vm34, %v390, 0.0
  %409 = vadd.xlane.f32.xlu0 %v408
  %v410 = vpop.xlane.xlu0 %409
  %v411 = vsel %vm34, %v391, 0.0
  %412 = vadd.xlane.f32.xlu0 %v411
  %v413 = vpop.xlane.xlu0 %412
  %v414 = vsel %vm34, %v392, 0.0
  %415 = vadd.xlane.f32.xlu0 %v414
  %v416 = vpop.xlane.xlu0 %415
  %v417 = vrcp.pop 32.0
  %v418 = vmul.f32 32.0, %v417
  %v419 = vsub.f32 1.0, %v418
  %v420 = vmul.f32 %v417, %v419
  %v421 = vadd.f32 %v417, %v420
  %vm422 = vweird.f32 %v417
  %v423 = vsel %vm422, %v417, %v421
  %v424 = vmul.f32 %v395, %v423
  %v425 = vmul.f32 %v398, %v423
  %v426 = vmul.f32 %v401, %v423
  %v427 = vmul.f32 %v404, %v423
  %v428 = vmul.f32 %v407, %v423
  %v429 = vmul.f32 %v410, %v423
  %v430 = vmul.f32 %v413, %v423
  %v431 = vmul.f32 %v416, %v423
  %v432 = vsub.f32 %v385, %v424
  %v433 = vsub.f32 %v386, %v425
  %v434 = vsub.f32 %v387, %v426
  %v435 = vsub.f32 %v388, %v427
  %v436 = vsub.f32 %v389, %v428
  %v437 = vsub.f32 %v390, %v429
  %v438 = vsub.f32 %v391, %v430
  %v439 = vsub.f32 %v392, %v431
  %v440 = vmul.f32 %v432, %v432
  %v441 = vmul.f32 %v433, %v433
  %v442 = vmul.f32 %v434, %v434
  %v443 = vmul.f32 %v435, %v435
  %v444 = vmul.f32 %v436, %v436
  %v445 = vmul.f32 %v437, %v437
  %v446 = vmul.f32 %v438, %v438
  %v447 = vmul.f32 %v439, %v439
  %v448 = vsel %vm34, %v440, 0.0
  %449 = vadd.xlane.f32.xlu0 %v448
  %v450 = vpop.xlane.xlu0 %449
  %v451 = vsel %vm34, %v441, 0.0
  %452 = vadd.xlane.f32.xlu0 %v451
  %v453 = vpop.xlane.xlu0 %452
  %v454 = vsel %vm34, %v442, 0.0
  %455 = vadd.xlane.f32.xlu0 %v454
  %v456 = vpop.xlane.xlu0 %455
  %v457 = vsel %vm34, %v443, 0.0
  %458 = vadd.xlane.f32.xlu0 %v457
  %v459 = vpop.xlane.xlu0 %458
  %v460 = vsel %vm34, %v444, 0.0
  %461 = vadd.xlane.f32.xlu0 %v460
  %v462 = vpop.xlane.xlu0 %461
  %v463 = vsel %vm34, %v445, 0.0
  %464 = vadd.xlane.f32.xlu0 %v463
  %v465 = vpop.xlane.xlu0 %464
  %v466 = vsel %vm34, %v446, 0.0
  %467 = vadd.xlane.f32.xlu0 %v466
  %v468 = vpop.xlane.xlu0 %467
  %v469 = vsel %vm34, %v447, 0.0
  %470 = vadd.xlane.f32.xlu0 %v469
  %v471 = vpop.xlane.xlu0 %470
  %v472 = vmul.f32 %v450, %v423
  %v473 = vmul.f32 %v453, %v423
  %v474 = vmul.f32 %v456, %v423
  %v475 = vmul.f32 %v459, %v423
  %v476 = vmul.f32 %v462, %v423
  %v477 = vmul.f32 %v465, %v423
  %v478 = vmul.f32 %v468, %v423
  %v479 = vmul.f32 %v471, %v423
  %v480 = vadd.f32 %v472, 1e-05
  %v481 = vadd.f32 %v473, 1e-05
  %v482 = vadd.f32 %v474, 1e-05
  %v483 = vadd.f32 %v475, 1e-05
  %v484 = vadd.f32 %v476, 1e-05
  %v485 = vadd.f32 %v477, 1e-05
  %v486 = vadd.f32 %v478, 1e-05
  %v487 = vadd.f32 %v479, 1e-05
  %v488 = vrsqrt.pop %v480
  %v489 = vmul.f32 %v488, %v480
  %v490 = vmul.f32 %v489, %v488
  %v491 = vmul.f32 0.5, %v490
  %v492 = vsub.f32 1.5, %v491
  %v493 = vmul.f32 %v488, %v492
  %vm494 = vweird.f32 %v480
  %vm495 = vweird.f32 %v488
  %vm496 = vmor %vm494, %vm495
  %v497 = vsel %vm496, %v488, %v493
  %v498 = vrsqrt.pop %v481
  %v499 = vmul.f32 %v498, %v481
  %v500 = vmul.f32 %v499, %v498
  %v501 = vmul.f32 0.5, %v500
  %v502 = vsub.f32 1.5, %v501
  %v503 = vmul.f32 %v498, %v502
  %vm504 = vweird.f32 %v481
  %vm505 = vweird.f32 %v498
  %vm506 = vmor %vm504, %vm505
  %v507 = vsel %vm506, %v498, %v503
  %v508 = vrsqrt.pop %v482
  %v509 = vmul.f32 %v508, %v482
  %v510 = vmul.f32 %v509, %v508
  %v511 = vmul.f32 0.5, %v510
  %v512 = vsub.f32 1.5, %v511
  %v513 = vmul.f32 %v508, %v512
  %vm514 = vweird.f32 %v482
  %vm515 = vweird.f32 %v508
  %vm516 = vmor %vm514, %vm515
  %v517 = vsel %vm516, %v508, %v513
  %v518 = vrsqrt.pop %v483
  %v519 = vmul.f32 %v518, %v483
  %v520 = vmul.f32 %v519, %v518
  %v521 = vmul.f32 0.5, %v520
  %v522 = vsub.f32 1.5, %v521
  %v523 = vmul.f32 %v518, %v522
  %vm524 = vweird.f32 %v483
  %vm525 = vweird.f32 %v518
  %vm526 = vmor %vm524, %vm525
  %v527 = vsel %vm526, %v518, %v523
  %v528 = vrsqrt.pop %v484
  %v529 = vmul.f32 %v528, %v484
  %v530 = vmul.f32 %v529, %v528
  %v531 = vmul.f32 0.5, %v530
  %v532 = vsub.f32 1.5, %v531
  %v533 = vmul.f32 %v528, %v532
  %vm534 = vweird.f32 %v484
  %vm535 = vweird.f32 %v528
  %vm536 = vmor %vm534, %vm535
  %v537 = vsel %vm536, %v528, %v533
  %v538 = vrsqrt.pop %v485
  %v539 = vmul.f32 %v538, %v485
  %v540 = vmul.f32 %v539, %v538
  %v541 = vmul.f32 0.5, %v540
  %v542 = vsub.f32 1.5, %v541
  %v543 = vmul.f32 %v538, %v542
  %vm544 = vweird.f32 %v485
  %vm545 = vweird.f32 %v538
  %vm546 = vmor %vm544, %vm545
  %v547 = vsel %vm546, %v538, %v543
  %v548 = vrsqrt.pop %v486
  %v549 = vmul.f32 %v548, %v486
  %v550 = vmul.f32 %v549, %v548
  %v551 = vmul.f32 0.5, %v550
  %v552 = vsub.f32 1.5, %v551
  %v553 = vmul.f32 %v548, %v552
  %vm554 = vweird.f32 %v486
  %vm555 = vweird.f32 %v548
  %vm556 = vmor %vm554, %vm555
  %v557 = vsel %vm556, %v548, %v553
  %v558 = vrsqrt.pop %v487
  %v559 = vmul.f32 %v558, %v487
  %v560 = vmul.f32 %v559, %v558
  %v561 = vmul.f32 0.5, %v560
  %v562 = vsub.f32 1.5, %v561
  %v563 = vmul.f32 %v558, %v562
  %vm564 = vweird.f32 %v487
  %vm565 = vweird.f32 %v558
  %vm566 = vmor %vm564, %vm565
  %v567 = vsel %vm566, %v558, %v563
  %v568 = vmul.f32 %v432, %v497
  %v569 = vmul.f32 %v433, %v507
  %v570 = vmul.f32 %v434, %v517
  %v571 = vmul.f32 %v435, %v527
  %v572 = vmul.f32 %v436, %v537
  %v573 = vmul.f32 %v437, %v547
  %v574 = vmul.f32 %v438, %v557
  %v575 = vmul.f32 %v439, %v567
  %v576 = vperm.slane %v318, 1
  %v577 = vmul.f32 %v568, %v576
  %v578 = vmul.f32 %v569, %v576
  %v579 = vmul.f32 %v570, %v576
  %v580 = vmul.f32 %v571, %v576
  %v581 = vmul.f32 %v572, %v576
  %v582 = vmul.f32 %v573, %v576
  %v583 = vmul.f32 %v574, %v576
  %v584 = vmul.f32 %v575, %v576
  %v585 = vperm.slane %v318, 2
  %v586 = vadd.f32 %v577, %v585
  %v587 = vadd.f32 %v578, %v585
  %v588 = vadd.f32 %v579, %v585
  %v589 = vadd.f32 %v580, %v585
  %v590 = vadd.f32 %v581, %v585
  %v591 = vadd.f32 %v582, %v585
  %v592 = vadd.f32 %v583, %v585
  %v593 = vadd.f32 %v584, %v585
  %594 = vst.msk [vmem:[%s5] sm:$0xff] %vm34, %v586
  %595 = vst.msk [vmem:[%s5 + $0x8] sm:$0xff] %vm34, %v587
  %596 = vst.msk [vmem:[%s5 + $0x10] sm:$0xff] %vm34, %v588
  %597 = vst.msk [vmem:[%s5 + $0x18] sm:$0xff] %vm34, %v589
  %598 = vst.msk [vmem:[%s5 + $0x20] sm:$0xff] %vm34, %v590
  %599 = vst.msk [vmem:[%s5 + $0x28] sm:$0xff] %vm34, %v591
  %600 = vst.msk [vmem:[%s5 + $0x30] sm:$0xff] %vm34, %v592
  %601 = vst.msk [vmem:[%s5 + $0x38] sm:$0xff] %vm34, %v593
  // Predicated region
  $region22: #{tpu_custom_call.1} parent=0 // pred_check
    _
  $region23: #{tpu_custom_call.1} parent=0 // pred_check_branch
    %603 = sbr.rel (0) target = $region25
  $region24: #{tpu_custom_call.1} parent=0 // pred_region
    _
  $region25: #{tpu_custom_call.1} parent=0 // pred_fallthru
    _
  // Predicated region
  $region26: #{tpu_custom_call.1} parent=0 // pred_check
    _
  $region27: #{tpu_custom_call.1} parent=0 // pred_check_branch
    %605 = sbr.rel (0) target = $region29
  $region28: #{tpu_custom_call.1} parent=0 // pred_region
    _
  $region29: #{tpu_custom_call.1} parent=0 // pred_fallthru
    _

</llo_original>
